<compile_context>
chip_gen: v6e
topology: v6e:2x2x1
jax: 0.10.0
libtpu: 0.0.40
codegen_flags: <defaults>
</compile_context>

<pallas_src>
import jax
import jax.numpy as jnp
from jax.experimental import pallas as pl
from jax.experimental.pallas import tpu as pltpu


def _round_up(x, m):
    return (x + m - 1) // m * m


def attention_kernel(enc_ref, w2_ref, beff_ref, wv_ref, ctx_ref):
    # enc_ref : (tm, E_pad)     row tile of flattened encoder outputs
    # w2_ref  : (E_pad, H_pad)  encoder half of the cat-Linear weight (resident)
    # beff_ref: (1, H_pad)      hidden @ W1 + b, broadcast row (resident)
    # wv_ref  : (1, H_pad)      v-layer weight as broadcast row (resident)
    # ctx_ref : (tm, E_pad)     lane-dense output block
    enc = enc_ref[...]

    # energy = tanh(cat(hidden, enc) @ W.T + b) == tanh(enc @ W2 + b_eff)
    energy = jnp.tanh(
        jnp.dot(enc, w2_ref[...], preferred_element_type=jnp.float32)
        + beff_ref[...]
    )                                                            # (tm, H_pad)

    # score = v(energy): VPU multiply + lane (XLU) reduction instead of an
    # (H,1) MXU matmul that would light a single output lane.
    score = jnp.sum(energy * wv_ref[...], axis=-1, keepdims=True)  # (tm, 1)

    # Softmax over torch dim=1 (the sequence axis).  The module's bmm forces
    # S == 1, so each per-batch softmax group holds exactly one element:
    # e = exp(score - max) and denom = sum == e, hence att = e / denom is
    # exactly 1.0 (IEEE x/x for finite nonzero x) -- bit-exact, no approximate
    # reciprocal needed.
    m = score                       # max over the 1-element group
    e = jnp.exp(score - m)          # exp(0) on the real path
    denom = e                       # sum over the 1-element group
    att = e / denom                 # == 1.0 exactly                # (tm, 1)

    # context = bmm(attention (B,1,1), enc (B,1,E)) == per-row scale of enc.
    ctx_ref[...] = (att * enc).astype(ctx_ref.dtype)


@jax.jit
def attention_forward(hidden, encoder_outputs, w_attn, b_attn, w_v):
    """hidden: (1, Dh); encoder_outputs: (B, S, E);
    w_attn: (H, Dh+E) torch nn.Linear layout; b_attn: (H,); w_v: (1, H)."""
    B, S, E = encoder_outputs.shape
    Dh = hidden.shape[-1]
    H = w_attn.shape[0]
    assert hidden.shape[0] == 1, "torch repeat semantics require hidden batch == 1"
    assert Dh + E == w_attn.shape[1], "cat feature dim must equal 4*hidden_size"
    assert S == 1, "original torch.bmm only type-checks for seq_len == 1"

    # ---- glue (traced once under jit) --------------------------------------
    w_t = w_attn.T                       # (Dh+E, H)
    w1 = w_t[:Dh, :]                     # (Dh, H): multiplies the repeated hidden
    w2 = w_t[Dh:, :]                     # (E,  H): multiplies encoder_outputs
    # Folding hidden @ W1 into the bias is valid only because hidden has batch
    # dim 1 and is broadcast over B (exactly what the module's repeat does).
    b_eff = hidden @ w1 + b_attn[None, :]            # (1, H)
    wv_row = w_v.reshape(1, H)                       # (1, H)

    # ---- lane/sublane-dense padded layout -----------------------------------
    LANE, SUB = 128, 8
    M = B * S
    E_pad = _round_up(E, LANE)
    H_pad = _round_up(H, LANE)
    tm = min(512, _round_up(M, SUB))     # >=512-row tiles once the batch is large
    M_pad = _round_up(M, tm)

    dt = encoder_outputs.dtype
    enc_p = jnp.zeros((M_pad, E_pad), dt).at[:M, :E].set(
        encoder_outputs.reshape(M, E))
    w2_p = jnp.zeros((E_pad, H_pad), w2.dtype).at[:E, :H].set(w2)
    be_p = jnp.zeros((1, H_pad), b_eff.dtype).at[:, :H].set(b_eff)
    wv_p = jnp.zeros((1, H_pad), wv_row.dtype).at[:, :H].set(wv_row)

    grid = (M_pad // tm,)
    ctx_p = pl.pallas_call(
        attention_kernel,
        out_shape=jax.ShapeDtypeStruct((M_pad, E_pad), dt),
        grid_spec=pltpu.PrefetchScalarGridSpec(
            num_scalar_prefetch=0,
            grid=grid,
            in_specs=[
                pl.BlockSpec((tm, E_pad), lambda i: (i, 0)),     # enc: row-tiled
                pl.BlockSpec((E_pad, H_pad), lambda i: (0, 0)),  # W2: VMEM-resident
                pl.BlockSpec((1, H_pad), lambda i: (0, 0)),      # b_eff: resident
                pl.BlockSpec((1, H_pad), lambda i: (0, 0)),      # w_v: resident
            ],
            out_specs=pl.BlockSpec((tm, E_pad), lambda i: (i, 0)),
        ),
        compiler_params=pltpu.CompilerParams(
            # Row tiles are independent -> shard across v7x's two TensorCores
            # (harmless on single-TC v5e/v6e).
            dimension_semantics=("parallel",),
            # Tiles here are tiny (<1 MiB); raise vmem_limit_bytes if tm / E
            # ever grow enough to exceed the scoped default (16 MiB v5e,
            # 32 MiB v6e/v7x).
        ),
    )(enc_p, w2_p, be_p, wv_p)

    return ctx_p[:M, :E].reshape(B, S, E)


def attention_reference(hidden, encoder_outputs, w_attn, b_attn, w_v):
    """Pure-JAX mirror of the PyTorch forward (for correctness checking)."""
    B, S, E = encoder_outputs.shape
    hid_rep = jnp.broadcast_to(hidden[:, None, :], (B, S, hidden.shape[1]))
    cat = jnp.concatenate([hid_rep, encoder_outputs], axis=-1)
    energy = jnp.tanh(cat @ w_attn.T + b_attn)
    score = energy @ w_v.T                               # (B, S, 1)
    att = jax.nn.softmax(score, axis=1)                  # softmax over dim=1
    context = jnp.matmul(att, encoder_outputs)           # bmm (requires S == 1)
    return context


if __name__ == "__main__":
    hidden_size = 32
    E = 2 * hidden_size          # encoder feature dim
    Dh = 2 * hidden_size         # decoder-hidden feature dim (Dh + E = 4*hidden_size)
    H = hidden_size
    B, S = 16, 1                 # seq_len must be 1 for the original bmm to type-check

    key = jax.random.PRNGKey(0)
    k1, k2, k3, k4, k5, k6 = jax.random.split(key, 6)

    # Deterministic parameter init (shapes follow nn.Linear in __init__).
    bound_attn = 1.0 / jnp.sqrt(4.0 * hidden_size)
    w_attn = jax.random.uniform(k1, (H, 4 * hidden_size),
                                minval=-bound_attn, maxval=bound_attn,
                                dtype=jnp.float32)
    b_attn = jax.random.uniform(k2, (H,),
                                minval=-bound_attn, maxval=bound_attn,
                                dtype=jnp.float32)
    bound_v = 1.0 / jnp.sqrt(float(hidden_size))
    w_v = jax.random.uniform(k3, (1, H),
                             minval=-bound_v, maxval=bound_v, dtype=jnp.float32)

    # Inputs.
    hidden = jax.random.normal(k4, (1, Dh), dtype=jnp.float32)
    encoder_outputs = jax.random.normal(k5, (B, S, E), dtype=jnp.float32)

    out = jax.block_until_ready(
        attention_forward(hidden, encoder_outputs, w_attn, b_attn, w_v))
    ref = attention_reference(hidden, encoder_outputs, w_attn, b_attn, w_v)
    assert out.shape == (B, S, E), out.shape
    # Bit-exact: the single-element softmax is computed as x/x == 1.0 exactly.
    assert bool(jnp.all(out == ref)), "mismatch vs pure-JAX reference"

    # Secondary check: a larger batch exercises the multi-step row grid
    # (tm = 512, grid = (3,)) and the row/lane zero-padding path.
    B2 = 1200
    enc_big = jax.random.normal(k6, (B2, S, E), dtype=jnp.float32)
    out2 = jax.block_until_ready(
        attention_forward(hidden, enc_big, w_attn, b_attn, w_v))
    ref2 = attention_reference(hidden, enc_big, w_attn, b_attn, w_v)
    assert bool(jnp.all(out2 == ref2)), "mismatch vs reference on tiled path"

    print("KERNEL_OK")
</pallas_src>

<mosaic_0001>
module attributes {stable_mosaic.version = 11 : i64} {
  func.func @attention_kernel(%arg0: i32, %arg1: memref<16x128xf32, #tpu.memory_space<vmem>>, %arg2: memref<128x128xf32, #tpu.memory_space<vmem>>, %arg3: memref<1x128xf32, #tpu.memory_space<vmem>>, %arg4: memref<1x128xf32, #tpu.memory_space<vmem>>, %arg5: memref<16x128xf32, #tpu.memory_space<vmem>>) attributes {dimension_semantics = [#tpu.dimension_semantics<parallel>], iteration_bounds = array<i64: 1>, scalar_prefetch = 0 : i64, scratch_operands = 0 : i64, tpu.core_type = #tpu.core_type<tc>, window_params = [{transform_indices = @transform_0, window_bounds = array<i64: 16, 128>}, {pipeline_mode = #tpu.pipeline_mode<synchronous>, transform_indices = @transform_1, window_bounds = array<i64: 128, 128>}, {pipeline_mode = #tpu.pipeline_mode<synchronous>, transform_indices = @transform_2, window_bounds = array<i64: 1, 128>}, {pipeline_mode = #tpu.pipeline_mode<synchronous>, transform_indices = @transform_3, window_bounds = array<i64: 1, 128>}, {transform_indices = @transform_4, window_bounds = array<i64: 16, 128>}]} {
    %c0 = arith.constant 0 : index
    %c0_0 = arith.constant 0 : index
    %0 = vector.load %arg1[%c0, %c0_0] : memref<16x128xf32, #tpu.memory_space<vmem>>, vector<16x128xf32>
    %c0_1 = arith.constant 0 : index
    %c0_2 = arith.constant 0 : index
    %1 = vector.load %arg2[%c0_1, %c0_2] : memref<128x128xf32, #tpu.memory_space<vmem>>, vector<128x128xf32>
    %cst = arith.constant dense<0.000000e+00> : vector<16x128xf32>
    %2 = tpu.matmul %0, %1, %cst {dimension_numbers = #tpu.dot_dimension_numbers<[1], [0], [0], [1], [0, 0, 1, 1], [], []>} : vector<16x128xf32>, vector<128x128xf32>, vector<16x128xf32> -> vector<16x128xf32>
    %c0_3 = arith.constant 0 : index
    %c0_4 = arith.constant 0 : index
    %3 = vector.load %arg3[%c0_3, %c0_4] : memref<1x128xf32, #tpu.memory_space<vmem>>, vector<1x128xf32>
    %4 = vector.broadcast %3 : vector<1x128xf32> to vector<16x128xf32>
    %5 = arith.addf %2, %4 : vector<16x128xf32>
    %6 = math.tanh %5 : vector<16x128xf32>
    %c0_5 = arith.constant 0 : index
    %c0_6 = arith.constant 0 : index
    %7 = vector.load %arg4[%c0_5, %c0_6] : memref<1x128xf32, #tpu.memory_space<vmem>>, vector<1x128xf32>
    %8 = vector.broadcast %7 : vector<1x128xf32> to vector<16x128xf32>
    %9 = arith.mulf %6, %8 : vector<16x128xf32>
    %cst_7 = arith.constant dense<0.000000e+00> : vector<16xf32>
    %10 = vector.multi_reduction <add>, %9, %cst_7 [1] : vector<16x128xf32> to vector<16xf32>
    %11 = vector.shape_cast %10 : vector<16xf32> to vector<16x1xf32>
    %12 = arith.subf %11, %11 : vector<16x1xf32>
    %13 = math.exp %12 : vector<16x1xf32>
    %14 = arith.divf %13, %13 : vector<16x1xf32>
    %15 = vector.broadcast %14 : vector<16x1xf32> to vector<16x128xf32>
    %16 = arith.mulf %15, %0 : vector<16x128xf32>
    %c0_8 = arith.constant 0 : index
    %c0_9 = arith.constant 0 : index
    %17 = vector.load %arg5[%c0_8, %c0_9] : memref<16x128xf32, #tpu.memory_space<vmem>>, vector<16x128xf32>
    tpu.vector_store %arg5[%c0_8, %c0_9], %16 {strides = array<i32>} : memref<16x128xf32, #tpu.memory_space<vmem>>, vector<16x128xf32>,
    return
  }
  func.func @transform_0(%arg0: i32) -> (i32, i32) {
    %c0_i32 = arith.constant 0 : i32
    %c0_i32_0 = arith.constant 0 : i32
    return %arg0, %c0_i32 : i32, i32
  }
  func.func @transform_1(%arg0: i32) -> (i32, i32) {
    %c0_i32 = arith.constant 0 : i32
    %c0_i32_0 = arith.constant 0 : i32
    %c0_i32_1 = arith.constant 0 : i32
    return %c0_i32, %c0_i32_0 : i32, i32
  }
  func.func @transform_2(%arg0: i32) -> (i32, i32) {
    %c0_i32 = arith.constant 0 : i32
    %c0_i32_0 = arith.constant 0 : i32
    %c0_i32_1 = arith.constant 0 : i32
    return %c0_i32, %c0_i32_0 : i32, i32
  }
  func.func @transform_3(%arg0: i32) -> (i32, i32) {
    %c0_i32 = arith.constant 0 : i32
    %c0_i32_0 = arith.constant 0 : i32
    %c0_i32_1 = arith.constant 0 : i32
    return %c0_i32, %c0_i32_0 : i32, i32
  }
  func.func @transform_4(%arg0: i32) -> (i32, i32) {
    %c0_i32 = arith.constant 0 : i32
    %c0_i32_0 = arith.constant 0 : i32
    return %arg0, %c0_i32 : i32, i32
  }
}

</mosaic_0001>

<llo_original>
// kernel: attention_forward.1
$region0: #{attention_forward.1}
  #allocation0 [shape = 'u32[]', space=smem, size = 0x4, offset = 0x4, fixed_abs, tag = 'smem constant byte address 0x4 - core index']
  #allocation1 [shape = 'u32[144,128]{1,0:T(1,128)}', space=vmem, size = 0x12000, scoped, tag = 'internal scratch']
  %s0 = inlined_call_operand.vmem [shape: f32[16,128], index: 0, kind: input, shape index: {}]
  %s1 = inlined_call_operand.vmem [shape: f32[128,128], index: 1, kind: input, shape index: {}]
  %s2 = inlined_call_operand.vmem [shape: f32[1,128], index: 2, kind: input, shape index: {}]
  %s3 = inlined_call_operand.vmem [shape: f32[1,128], index: 3, kind: input, shape index: {}]
  %s4 = inlined_call_operand.hbm [shape: f32[16,128], index: 4, kind: output, shape index: {}]
  %s5 = sld [smem:[#allocation0]]
  $region26: #{attention_forward.1} parent=0
    _
  %s7 = ssub.s32 1, %s5
  %s8 = scalar_select 0, %s7, %s5
  $region1: #{attention_forward.1} parent=0
    #allocation2 [shape = 'u8[8192]{0}', space=vmem, size = 0x2000, scoped, tag = 'output window, operand 0, single buffered']
    #allocation3 [shape = 's32[1]{0}', space=sflag, size = 0x4, scoped, tag = 'scoped memory for attention_forward.1']
    %9 = vsyncpa [#allocation3], 0
    // Predicated region
    $region2: #{attention_forward.1} parent=1 // pred_check
      _
    $region3: #{attention_forward.1} parent=1 // pred_check_branch
      %11 = sbr.rel (0) target = $region5
    $region4: #{attention_forward.1} parent=1 // pred_region
      _
    $region5: #{attention_forward.1} parent=1 // pred_fallthru
      _
    // Predicated region
    $region6: #{attention_forward.1} parent=1 // pred_check
      _
    $region7: #{attention_forward.1} parent=1 // pred_check_branch
      %13 = sbr.rel (0) target = $region9
    $region8: #{attention_forward.1} parent=1 // pred_region
      _
    $region9: #{attention_forward.1} parent=1 // pred_fallthru
      _
    // Predicated region
    $region10: #{attention_forward.1} parent=1 // pred_check
      _
    $region11: #{attention_forward.1} parent=1 // pred_check_branch
      %15 = sbr.rel (0) target = $region13
    $region12: #{attention_forward.1} parent=1 // pred_region
      _
    $region13: #{attention_forward.1} parent=1 // pred_fallthru
      _
    // Predicated region
    $region14: #{attention_forward.1} parent=1 // pred_check
      _
    $region15: #{attention_forward.1} parent=1 // pred_check_branch
      %17 = sbr.rel (0) target = $region17
    $region16: #{attention_forward.1} parent=1 // pred_region
      _
    $region17: #{attention_forward.1} parent=1 // pred_fallthru
      _
    %v18 = vld [vmem:[%s0] sm:$0xff]
    %v19 = vld [vmem:[%s0 + $0x8] sm:$0xff]
    %v20 = vld [vmem:[%s1] sm:$0xff]
    %v21 = vld [vmem:[%s1 + $0x8] sm:$0xff]
    %v22 = vld [vmem:[%s1 + $0x10] sm:$0xff]
    %v23 = vld [vmem:[%s1 + $0x18] sm:$0xff]
    %v24 = vld [vmem:[%s1 + $0x20] sm:$0xff]
    %v25 = vld [vmem:[%s1 + $0x28] sm:$0xff]
    %v26 = vld [vmem:[%s1 + $0x30] sm:$0xff]
    %v27 = vld [vmem:[%s1 + $0x38] sm:$0xff]
    %v28 = vld [vmem:[%s1 + $0x40] sm:$0xff]
    %v29 = vld [vmem:[%s1 + $0x48] sm:$0xff]
    %v30 = vld [vmem:[%s1 + $0x50] sm:$0xff]
    %v31 = vld [vmem:[%s1 + $0x58] sm:$0xff]
    %v32 = vld [vmem:[%s1 + $0x60] sm:$0xff]
    %v33 = vld [vmem:[%s1 + $0x68] sm:$0xff]
    %v34 = vld [vmem:[%s1 + $0x70] sm:$0xff]
    %v35 = vld [vmem:[%s1 + $0x78] sm:$0xff]
    %v36 = vld [vmem:[%s2] sm:$0x1]
    %v38 = vlaneseq
    %v39 = vshrl.u32 %v38, 7
    %v40 = vsub.s32 0, %v39
    %v41 = vrot.slane %v36, %v40
    %43 = vmatprep.subr.mxu0 0.0
    %44 = vmatpush1.msra.mxu0 %v35
    %45 = vmatprep.subr.mxu0 0.0
    %46 = vmatpush1.msra.mxu0 %v34
    %47 = vmatprep.subr.mxu0 0.0
    %48 = vmatpush1.msra.mxu0 %v33
    %49 = vmatprep.subr.mxu0 0.0
    %50 = vmatpush1.msra.mxu0 %v32
    %51 = vmatprep.subr.mxu0 0.0
    %52 = vmatpush1.msra.mxu0 %v31
    %53 = vmatprep.subr.mxu0 0.0
    %54 = vmatpush1.msra.mxu0 %v30
    %55 = vmatprep.subr.mxu0 0.0
    %56 = vmatpush1.msra.mxu0 %v29
    %57 = vmatprep.subr.mxu0 0.0
    %58 = vmatpush1.msra.mxu0 %v28
    %59 = vmatprep.subr.mxu0 0.0
    %60 = vmatpush1.msra.mxu0 %v27
    %61 = vmatprep.subr.mxu0 0.0
    %62 = vmatpush1.msra.mxu0 %v26
    %63 = vmatprep.subr.mxu0 0.0
    %64 = vmatpush1.msra.mxu0 %v25
    %65 = vmatprep.subr.mxu0 0.0
    %66 = vmatpush1.msra.mxu0 %v24
    %67 = vmatprep.subr.mxu0 0.0
    %68 = vmatpush1.msra.mxu0 %v23
    %69 = vmatprep.subr.mxu0 0.0
    %70 = vmatpush1.msra.mxu0 %v22
    %71 = vmatprep.subr.mxu0 0.0
    %72 = vmatpush1.msra.mxu0 %v21
    %73 = vmatprep.subr.mxu0 0.0
    %74 = vmatpush1.msra.mxu0 %v20
    %75 = vmatprep.subr.mxu0 0.0
    %76 = vmatpush2.msra.mxu0 0.0
    %77 = vmatprep.subr.mxu0 0.0
    %78 = vmatpush2.msra.mxu0 0.0
    %79 = vmatprep.subr.mxu0 0.0
    %80 = vmatpush2.msra.mxu0 0.0
    %81 = vmatprep.subr.mxu0 0.0
    %82 = vmatpush2.msra.mxu0 0.0
    %83 = vmatprep.subr.mxu0 0.0
    %84 = vmatpush2.msra.mxu0 0.0
    %85 = vmatprep.subr.mxu0 0.0
    %86 = vmatpush2.msra.mxu0 0.0
    %87 = vmatprep.subr.mxu0 0.0
    %88 = vmatpush2.msra.mxu0 0.0
    %89 = vmatprep.subr.mxu0 0.0
    %90 = vmatpush2.msra.mxu0 0.0
    %91 = vmatprep.subr.mxu0 0.0
    %92 = vmatpush2.msra.mxu0 0.0
    %93 = vmatprep.subr.mxu0 0.0
    %94 = vmatpush2.msra.mxu0 0.0
    %95 = vmatprep.subr.mxu0 0.0
    %96 = vmatpush2.msra.mxu0 0.0
    %97 = vmatprep.subr.mxu0 0.0
    %98 = vmatpush2.msra.mxu0 0.0
    %99 = vmatprep.subr.mxu0 0.0
    %100 = vmatpush2.msra.mxu0 0.0
    %101 = vmatprep.subr.mxu0 0.0
    %102 = vmatpush2.msra.mxu0 0.0
    %103 = vmatprep.subr.mxu0 0.0
    %104 = vmatpush2.msra.mxu0 0.0
    %105 = vmatprep.subr.mxu0 0.0
    %106 = vmatpush2.msra.mxu0 0.0
    %107 = vmatprep.mubr.f32.mxu0 0.0
    %108 = vmatmul.mubr.f32.gmra.mxu0 %v18
    %v109 = vpop.f32.mrf.mxu0
    %v110 = vadd.f32 %v41, %v109
    %v111 = vpop.f32.mrf.mxu0
    %112 = vmatprep.mubr.f32.mxu0 0.0
    %113 = vmatmul.mubr.f32.gmra.mxu0 %v19
    %v114 = vpop.f32.mrf.mxu0
    %v115 = vadd.f32 %v41, %v114
    %v116 = vpop.f32.mrf.mxu0
    %117 = vdwg.mxu0
    %v118 = vtanh.pop %v110
    %v119 = vtanh.pop %v115
    %v120 = vld [vmem:[%s3] sm:$0x1]
    %v122 = vlaneseq
    %v123 = vshrl.u32 %v122, 7
    %v124 = vsub.s32 0, %v123
    %v125 = vrot.slane %v120, %v124
    %v127 = vmul.f32 %v118, %v125
    %v128 = vmul.f32 %v119, %v125
    %129 = vadd.xlane.f32.xlu0 %v127
    %v130 = vpop.xlane.xlu0 %129
    %131 = vadd.xlane.f32.xlu0 %v128
    %v132 = vpop.xlane.xlu0 %131
    %v133 = vsub.f32 %v130, %v130
    %v134 = vsub.f32 %v132, %v132
    %v135 = vmul.f32 %v133, 1.442695
    %v136 = vpow.pop %v135
    %v137 = vmul.f32 %v134, 1.442695
    %v138 = vpow.pop %v137
    %v139 = vrcp.pop %v136
    %v140 = vmul.f32 %v136, %v139
    %v141 = vrcp.pop %v138
    %v142 = vmul.f32 %v138, %v141
    %v143 = vmul.f32 %v140, %v18
    %v144 = vmul.f32 %v142, %v19
    %145 = vst [vmem:[#allocation2] sm:$0xff] %v143
    %146 = vst [vmem:[#allocation2 + $0x8] sm:$0xff] %v144
    // Predicated region
    $region18: #{attention_forward.1} parent=1 // pred_check
      _
    $region19: #{attention_forward.1} parent=1 // pred_check_branch
      %148 = sbr.rel (0) target = $region21
    $region20: #{attention_forward.1} parent=1 // pred_region
      %s150 = ssub.s32 256, 256
      %151 = vsyncadd [#allocation3], %s150
      %s152 = sshll.u32 [#allocation2], 4
      %s153 = int_to_ptr.vmem [resolvable:$true] %s152
      %158 = dma.vmem_to_hbm [thread:$0]  %s153, 256, %s4, [#allocation3], 128, 128, 8
    $region21: #{attention_forward.1} parent=1 // pred_fallthru
      _
    // Predicated region
    $region22: #{attention_forward.1} parent=1 // pred_check
      _
    $region23: #{attention_forward.1} parent=1 // pred_check_branch
      %160 = sbr.rel (0) target = $region25
    $region24: #{attention_forward.1} parent=1 // pred_region
      %161 = dma.done [#allocation3], 256
    $region25: #{attention_forward.1} parent=1 // pred_fallthru
      _
    %162 = vsyncpa [#allocation3], 1

</llo_original>
